<compile_context>
chip_gen: v7x
topology: tpu7x:2x2x1
jax: 0.10.0
libtpu: 0.0.40
codegen_flags: <defaults>
</compile_context>

<pallas_src>
import functools

import numpy as np
import jax
import jax.numpy as jnp
from jax.experimental import pallas as pl
from jax.experimental.pallas import tpu as pltpu


_TARGET_BLOCK_BYTES = 2 * 1024 * 1024   # ~2 MiB blocks: past the HBM-roofline knee
_VMEM_LIMIT_BYTES = 48 * 1024 * 1024    # safe on v5e/v6e (128 MiB) and v7x (64 MiB)


def _choose_tiles(n_rows, n_lanes, itemsize, target_bytes):
    """Pick (row_tile, lane_tile) giving ~target_bytes per block.

    lane_tile is a multiple of 128 (or the full lane extent); row_tile is a
    multiple of 8 (or the full row extent).
    """
    target_elems = max(1, target_bytes // itemsize)
    if n_lanes <= 128 or n_lanes * 8 <= target_elems:
        lane_tile = n_lanes                                  # full lane extent
    else:
        lane_tile = max(128, min(n_lanes, target_elems // 8) // 128 * 128)
    rows = max(1, target_elems // lane_tile)
    if rows >= n_rows:
        row_tile = n_rows                                    # full row extent
    else:
        row_tile = max(8, (rows // 8) * 8)
    return row_tile, lane_tile


def _wscale_kernel(x_ref, b_ref, o_ref, *, scale, bias_axis, row_tile, lane_tile):
    """out = x * scale + bias; bias is VMEM-resident and sliced in-kernel."""
    if bias_axis == 0:
        start = pl.program_id(0) * row_tile
        if row_tile % 8 == 0:
            start = pl.multiple_of(start, 8)
        b = b_ref[pl.ds(start, row_tile), :]                 # (row_tile, 1)
    else:
        start = pl.program_id(1) * lane_tile
        if lane_tile % 128 == 0:
            start = pl.multiple_of(start, 128)
        b = b_ref[:, pl.ds(start, lane_tile)]                # (1, lane_tile)
    x = x_ref[...].astype(jnp.float32)
    o_ref[...] = (x * jnp.float32(scale) + b.astype(jnp.float32)).astype(o_ref.dtype)


def _wscale_impl(x, bias, scale, *, block_bytes=_TARGET_BLOCK_BYTES):
    N, C, H, W = x.shape
    HW = H * W
    itemsize = jnp.dtype(x.dtype).itemsize

    if HW % 128 == 0 and HW >= 512:
        # Large, aligned spatial maps: rows = N*C, lanes = H*W (lane dense).
        n_rows, n_lanes, bias_axis = N * C, HW, 0
    else:
        # Small / unaligned spatial maps: fold channels into the lane axis so
        # the output last dim stays a large multiple of 128 where possible.
        n_rows, n_lanes, bias_axis = N, C * HW, 1

    row_tile, lane_tile = _choose_tiles(n_rows, n_lanes, itemsize, block_bytes)
    grid = (pl.cdiv(n_rows, row_tile), pl.cdiv(n_lanes, lane_tile))

    x2d = x.reshape(n_rows, n_lanes)

    # Bias: tiny -> keep it fully resident in VMEM (no per-step DMA stream).
    # Pad to the tiled extent so the in-kernel pl.ds slice never reads OOB on a
    # ragged trailing block (padded rows/lanes are masked out on store anyway).
    bias_c = bias.astype(x.dtype)
    if bias_axis == 0:
        b = jnp.tile(bias_c, (N,))                 # row r = n*C + c -> bias[c]
        pad = grid[0] * row_tile - n_rows
        if pad:
            b = jnp.pad(b, (0, pad))
        b2d = b.reshape(grid[0] * row_tile, 1)
    else:
        b = jnp.repeat(bias_c, HW)                 # lane l = c*HW + hw -> bias[c]
        pad = grid[1] * lane_tile - n_lanes
        if pad:
            b = jnp.pad(b, (0, pad))
        b2d = b.reshape(1, grid[1] * lane_tile)

    kernel = functools.partial(
        _wscale_kernel, scale=float(scale), bias_axis=bias_axis,
        row_tile=row_tile, lane_tile=lane_tile)

    out2d = pl.pallas_call(
        kernel,
        out_shape=jax.ShapeDtypeStruct((n_rows, n_lanes), x.dtype),
        grid_spec=pltpu.PrefetchScalarGridSpec(
            num_scalar_prefetch=0,
            grid=grid,
            in_specs=[
                pl.BlockSpec((row_tile, lane_tile), lambda i, j: (i, j)),
                # Whole bias resident in VMEM; not blocked, not pipelined.
                pl.BlockSpec(memory_space=pltpu.MemorySpace.VMEM),
            ],
            out_specs=pl.BlockSpec((row_tile, lane_tile), lambda i, j: (i, j)),
        ),
        compiler_params=pltpu.CompilerParams(
            dimension_semantics=("parallel", "parallel"),
            vmem_limit_bytes=_VMEM_LIMIT_BYTES,
        ),
    )(x2d, b2d)

    return out2d.reshape(N, C, H, W)


# Trainable-bias support: pallas_call has no autodiff rule, so provide the
# (trivial) VJP explicitly:  dx = g * scale,  dbias = sum of g over (N, H, W).
@functools.partial(jax.custom_vjp, nondiff_argnums=(2,))
def wscale_forward(x, bias, scale):
    """WScaleLayer forward:  x[N,C,H,W] * scale + bias[C] (broadcast)."""
    return _wscale_impl(x, bias, scale)


def _wscale_fwd(x, bias, scale):
    return _wscale_impl(x, bias, scale), None


def _wscale_bwd(scale, _, g):
    dx = g * jnp.asarray(scale, dtype=g.dtype)
    dbias = jnp.sum(g, axis=(0, 2, 3))
    return dx, dbias


wscale_forward.defvjp(_wscale_fwd, _wscale_bwd)


if __name__ == "__main__":
    # Module config (matches the PyTorch spec).
    in_channels, out_channels, kernel_size = 4, 4, 3
    gain = np.sqrt(2.0)
    fan_in = in_channels * kernel_size * kernel_size
    scale = float(gain / np.sqrt(fan_in))

    # Small NCHW input consistent with forward(): channels = out_channels.
    N, C, H, W = 2, 4, 16, 16
    key = jax.random.PRNGKey(0)
    kx, kb, kw = jax.random.split(key, 3)
    x = jax.random.normal(kx, (N, C, H, W), dtype=jnp.float32)
    # nn.Parameter(torch.zeros(C)) is zero-init; use nonzero values here so the
    # per-channel broadcast is actually exercised.
    bias = jax.random.normal(kb, (C,), dtype=jnp.float32) * 0.1

    # --- Forward (lane-bias layout: HW=256 -> x flattened to (N, C*H*W)).
    out = jax.block_until_ready(wscale_forward(x, bias, scale))
    ref = x * scale + bias.reshape(1, -1, 1, 1)
    np.testing.assert_allclose(np.asarray(out), np.asarray(ref), rtol=1e-6, atol=1e-6)

    # --- Row-bias layout + multi-block (row, lane) grid: tiny block budget
    #     forces row_tile=8, lane_tile=128 so the sliced-bias path is exercised.
    x2 = jax.random.normal(kx, (2, 16, 32, 32), dtype=jnp.float32)
    b2 = jax.random.normal(kb, (16,), dtype=jnp.float32)
    out2 = jax.block_until_ready(_wscale_impl(x2, b2, scale, block_bytes=4096))
    ref2 = x2 * scale + b2.reshape(1, -1, 1, 1)
    np.testing.assert_allclose(np.asarray(out2), np.asarray(ref2), rtol=1e-6, atol=1e-6)

    # --- Ragged shapes (HW not a multiple of 128, partial trailing lane block).
    x3 = jax.random.normal(kx, (3, 4, 5, 7), dtype=jnp.float32)
    b3 = jax.random.normal(kb, (4,), dtype=jnp.float32) * 0.3
    out3 = jax.block_until_ready(_wscale_impl(x3, b3, scale, block_bytes=4096))
    ref3 = x3 * scale + b3.reshape(1, -1, 1, 1)
    np.testing.assert_allclose(np.asarray(out3), np.asarray(ref3), rtol=1e-6, atol=1e-6)

    # --- bf16 I/O path (halves HBM traffic; compute stays f32 in-kernel).
    xb = x.astype(jnp.bfloat16)
    bb = bias.astype(jnp.bfloat16)
    outb = jax.block_until_ready(wscale_forward(xb, bb, scale))
    refb = (xb.astype(jnp.float32) * scale
            + bb.astype(jnp.float32).reshape(1, -1, 1, 1)).astype(jnp.bfloat16)
    np.testing.assert_allclose(np.asarray(outb.astype(jnp.float32)),
                               np.asarray(refb.astype(jnp.float32)),
                               rtol=2e-2, atol=2e-2)

    # --- Gradients (bias is trainable in the PyTorch module).
    w_ct = jax.random.normal(kw, (N, C, H, W), dtype=jnp.float32)
    loss = lambda xx, bb_: jnp.sum(wscale_forward(xx, bb_, scale) * w_ct)
    dx, dbias = jax.grad(loss, argnums=(0, 1))(x, bias)
    np.testing.assert_allclose(np.asarray(dx), np.asarray(w_ct) * scale,
                               rtol=1e-6, atol=1e-6)
    np.testing.assert_allclose(np.asarray(dbias),
                               np.asarray(jnp.sum(w_ct, axis=(0, 2, 3))),
                               rtol=1e-5, atol=1e-5)

    print("KERNEL_OK")
</pallas_src>

<mosaic_0001>
module attributes {stable_mosaic.version = 11 : i64} {
  func.func @_wscale_kernel(%arg0: i32, %arg1: i32, %arg2: memref<2x1024xf32, #tpu.memory_space<vmem>>, %arg3: memref<1x1024xf32, #tpu.memory_space<vmem>>, %arg4: memref<2x1024xf32, #tpu.memory_space<vmem>>) attributes {dimension_semantics = [#tpu.dimension_semantics<parallel>, #tpu.dimension_semantics<parallel>], iteration_bounds = array<i64: 1, 1>, scalar_prefetch = 0 : i64, scratch_operands = 0 : i64, tpu.core_type = #tpu.core_type<tc>, window_params = [{transform_indices = @transform_0, window_bounds = array<i64: 2, 1024>}, {pipeline_mode = #tpu.pipeline_mode<synchronous>, transform_indices = @transform_1, window_bounds = array<i64: 1, 1024>}, {transform_indices = @transform_2, window_bounds = array<i64: 2, 1024>}]} {
    %c1024_i32 = arith.constant 1024 : i32
    %0 = arith.muli %arg1, %c1024_i32 : i32
    %1 = tpu.assume_multiple %0, 128 : i32
    %c0 = arith.constant 0 : index
    %2 = arith.index_cast %1 : i32 to index
    %3 = vector.load %arg3[%c0, %2] : memref<1x1024xf32, #tpu.memory_space<vmem>>, vector<1x1024xf32>
    %c0_0 = arith.constant 0 : index
    %c0_1 = arith.constant 0 : index
    %4 = vector.load %arg2[%c0_0, %c0_1] : memref<2x1024xf32, #tpu.memory_space<vmem>>, vector<2x1024xf32>
    %cst = arith.constant 0.235702261 : f32
    %5 = vector.broadcast %cst : f32 to vector<2x1024xf32>
    %6 = arith.mulf %4, %5 : vector<2x1024xf32>
    %7 = vector.broadcast %3 : vector<1x1024xf32> to vector<2x1024xf32>
    %8 = arith.addf %6, %7 : vector<2x1024xf32>
    %c0_2 = arith.constant 0 : index
    %c0_3 = arith.constant 0 : index
    %9 = vector.load %arg4[%c0_2, %c0_3] : memref<2x1024xf32, #tpu.memory_space<vmem>>, vector<2x1024xf32>
    tpu.vector_store %arg4[%c0_2, %c0_3], %8 {strides = array<i32>} : memref<2x1024xf32, #tpu.memory_space<vmem>>, vector<2x1024xf32>,
    return
  }
  func.func @transform_0(%arg0: i32, %arg1: i32) -> (i32, i32) {
    %c0_i32 = arith.constant 0 : i32
    return %arg0, %arg1 : i32, i32
  }
  func.func @transform_1(%arg0: i32, %arg1: i32) -> (i32, i32) {
    %c0_i32 = arith.constant 0 : i32
    %c0_i32_0 = arith.constant 0 : i32
    %c0_i32_1 = arith.constant 0 : i32
    return %c0_i32, %c0_i32_0 : i32, i32
  }
  func.func @transform_2(%arg0: i32, %arg1: i32) -> (i32, i32) {
    %c0_i32 = arith.constant 0 : i32
    return %arg0, %arg1 : i32, i32
  }
}

</mosaic_0001>

<llo_original>
// kernel: tpu_custom_call.1
$region0: #{tpu_custom_call.1}
  #allocation0 [shape = 'u32[]', space=smem, size = 0x4, offset = 0x4, fixed_abs, tag = 'smem constant byte address 0x4 - core index']
  #allocation1 [shape = 'u32[144,128]{1,0:T(1,128)}', space=vmem, size = 0x12000, scoped, tag = 'internal scratch']
  %s0 = inlined_call_operand.hbm [shape: f32[2,1024], index: 0, kind: input, shape index: {}]
  %s1 = inlined_call_operand.hbm [shape: f32[1,1024], index: 1, kind: input, shape index: {}]
  %s2 = inlined_call_operand.hbm [shape: f32[2,1024], index: 2, kind: output, shape index: {}]
  %s3 = sld [smem:[#allocation0]]
  $region26: #{tpu_custom_call.1} parent=0
    _
  %s5 = ssub.s32 1, %s3
  %s6 = scalar_select 0, %s5, %s3
  $region1: #{tpu_custom_call.1} parent=0
    #allocation2 [shape = 'u8[8192]{0}', space=vmem, size = 0x2000, scoped, tag = 'input window, operand 0, single buffered']
    #allocation3 [shape = 's32[1]{0}', space=sflag, size = 0x4, scoped, tag = 'scoped memory for tpu_custom_call.1']
    #allocation4 [shape = 's32[1]{0}', space=sflag, size = 0x4, scoped, tag = 'scoped memory for tpu_custom_call.1']
    #allocation5 [shape = 'u8[4096]{0}', space=vmem, size = 0x1000, scoped, tag = 'input window, operand 1, single buffered']
    #allocation6 [shape = 's32[1]{0}', space=sflag, size = 0x4, scoped, tag = 'scoped memory for tpu_custom_call.1']
    #allocation7 [shape = 'u8[8192]{0}', space=vmem, size = 0x2000, scoped, tag = 'output window, operand 0, single buffered']
    %7 = vsyncpa [#allocation3], 0
    %8 = vsyncpa [#allocation6], 0
    %9 = vsyncpa [#allocation4], 0
    // Predicated region
    $region2: #{tpu_custom_call.1} parent=1 // pred_check
      _
    $region3: #{tpu_custom_call.1} parent=1 // pred_check_branch
      %11 = sbr.rel (0) target = $region5
    $region4: #{tpu_custom_call.1} parent=1 // pred_region
      %s13 = ssub.s32 256, 256
      %14 = vsyncadd [#allocation3], %s13
      %s16 = sshll.u32 [#allocation2], 4
      %s17 = int_to_ptr.vmem [resolvable:$true] %s16
      %19 = dma.hbm_to_vmem [thread:$0]  %s0, 256, %s17, [#allocation3]
    $region5: #{tpu_custom_call.1} parent=1 // pred_fallthru
      _
    // Predicated region
    $region6: #{tpu_custom_call.1} parent=1 // pred_check
      _
    $region7: #{tpu_custom_call.1} parent=1 // pred_check_branch
      %21 = sbr.rel (0) target = $region9
    $region8: #{tpu_custom_call.1} parent=1 // pred_region
      %s23 = ssub.s32 128, 128
      %24 = vsyncadd [#allocation6], %s23
      %s26 = sshll.u32 [#allocation5], 4
      %s27 = int_to_ptr.vmem [resolvable:$true] %s26
      %29 = dma.hbm_to_vmem [thread:$0]  %s1, 128, %s27, [#allocation6]
    $region9: #{tpu_custom_call.1} parent=1 // pred_fallthru
      _
    // Predicated region
    $region10: #{tpu_custom_call.1} parent=1 // pred_check
      _
    $region11: #{tpu_custom_call.1} parent=1 // pred_check_branch
      %31 = sbr.rel (0) target = $region13
    $region12: #{tpu_custom_call.1} parent=1 // pred_region
      %32 = dma.done [#allocation3], 256
    $region13: #{tpu_custom_call.1} parent=1 // pred_fallthru
      _
    // Predicated region
    $region14: #{tpu_custom_call.1} parent=1 // pred_check
      _
    $region15: #{tpu_custom_call.1} parent=1 // pred_check_branch
      %34 = sbr.rel (0) target = $region17
    $region16: #{tpu_custom_call.1} parent=1 // pred_region
      %35 = dma.done [#allocation6], 128
    $region17: #{tpu_custom_call.1} parent=1 // pred_fallthru
      _
    %s36 = smul.u32 0, 1024
    %s37 = sshra.s32 %s36, 7
    %s38 = sand.u32 %s36, 127
    %s39 = scalar_lea.vmem [#allocation5], %s37
    %v40 = vld [vmem:[%s39] sm:$0xff]
    %v41 = vld [vmem:[#allocation2] sm:$0xff]
    %v42 = vld [vmem:[#allocation2 + $0x8] sm:$0xff]
    %v43 = vmul.f32 %v41, 0.23570226
    %v44 = vmul.f32 %v42, 0.23570226
    %v46 = vlaneseq
    %v47 = vshrl.u32 %v46, 7
    %v48 = vsub.s32 0, %v47
    %v49 = vrot.slane %v40, %v48
    %v50 = vlaneseq
    %v51 = vshrl.u32 %v50, 7
    %v52 = vsub.s32 1, %v51
    %v53 = vrot.slane %v40, %v52
    %v54 = vlaneseq
    %v55 = vshrl.u32 %v54, 7
    %v56 = vsub.s32 2, %v55
    %v57 = vrot.slane %v40, %v56
    %v58 = vlaneseq
    %v59 = vshrl.u32 %v58, 7
    %v60 = vsub.s32 3, %v59
    %v61 = vrot.slane %v40, %v60
    %v62 = vlaneseq
    %v63 = vshrl.u32 %v62, 7
    %v64 = vsub.s32 4, %v63
    %v65 = vrot.slane %v40, %v64
    %v66 = vlaneseq
    %v67 = vshrl.u32 %v66, 7
    %v68 = vsub.s32 5, %v67
    %v69 = vrot.slane %v40, %v68
    %v70 = vlaneseq
    %v71 = vshrl.u32 %v70, 7
    %v72 = vsub.s32 6, %v71
    %v73 = vrot.slane %v40, %v72
    %v74 = vlaneseq
    %v75 = vshrl.u32 %v74, 7
    %v76 = vsub.s32 7, %v75
    %v77 = vrot.slane %v40, %v76
    %v78 = vcombine.low %v49, %v53
    %v79 = vcombine.low %v57, %v61
    %v81 = vunpack.c.l.s4 1983009808
    %v82 = vunpack.c.0.s8 %v81
    %v83 = vlaneseq
    %v84 = vshrl.u32 %v83, 7
    %v85 = vsub.s32 %v82, %v84
    %v86 = vrot.slane %v78, %v85
    %v88 = vunpack.c.l.s4 1983009808
    %v89 = vunpack.c.0.s8 %v88
    %v90 = vlaneseq
    %v91 = vshrl.u32 %v90, 7
    %v92 = vsub.s32 %v89, %v91
    %v93 = vrot.slane %v79, %v92
    %v94 = vcombine.low %v86, %v93
    %v95 = vcombine.low %v65, %v69
    %v96 = vcombine.low %v73, %v77
    %v98 = vunpack.c.l.s4 1983009808
    %v99 = vunpack.c.0.s8 %v98
    %v100 = vlaneseq
    %v101 = vshrl.u32 %v100, 7
    %v102 = vsub.s32 %v99, %v101
    %v103 = vrot.slane %v95, %v102
    %v105 = vunpack.c.l.s4 1983009808
    %v106 = vunpack.c.0.s8 %v105
    %v107 = vlaneseq
    %v108 = vshrl.u32 %v107, 7
    %v109 = vsub.s32 %v106, %v108
    %v110 = vrot.slane %v96, %v109
    %v111 = vcombine.low %v103, %v110
    %v114 = vadd.f32 %v43, %v94
    %v115 = vadd.f32 %v44, %v111
    %116 = vst [vmem:[#allocation7] sm:$0xff] %v114
    %117 = vst [vmem:[#allocation7 + $0x8] sm:$0xff] %v115
    // Predicated region
    $region18: #{tpu_custom_call.1} parent=1 // pred_check
      _
    $region19: #{tpu_custom_call.1} parent=1 // pred_check_branch
      %119 = sbr.rel (0) target = $region21
    $region20: #{tpu_custom_call.1} parent=1 // pred_region
      %s121 = ssub.s32 256, 256
      %122 = vsyncadd [#allocation4], %s121
      %s124 = sshll.u32 [#allocation7], 4
      %s125 = int_to_ptr.vmem [resolvable:$true] %s124
      %127 = dma.vmem_to_hbm [thread:$0]  %s125, 256, %s2, [#allocation4]
    $region21: #{tpu_custom_call.1} parent=1 // pred_fallthru
      _
    // Predicated region
    $region22: #{tpu_custom_call.1} parent=1 // pred_check
      _
    $region23: #{tpu_custom_call.1} parent=1 // pred_check_branch
      %129 = sbr.rel (0) target = $region25
    $region24: #{tpu_custom_call.1} parent=1 // pred_region
      %130 = dma.done [#allocation4], 256
    $region25: #{tpu_custom_call.1} parent=1 // pred_fallthru
      _
    %131 = vsyncpa [#allocation3], 1
    %132 = vsyncpa [#allocation6], 1
    %133 = vsyncpa [#allocation4], 1

</llo_original>
